<compile_context>
chip_gen: v5e
topology: v5e:2x2
jax: 0.10.0
libtpu: 0.0.40
codegen_flags: <defaults>
</compile_context>

<pallas_src>
import functools

import jax
import jax.numpy as jnp
from jax.experimental import pallas as pl
from jax.experimental.pallas import tpu as pltpu


def _encoder_kernel(obs_ref, emb_ref, w1a_ref, w1b_ref, b1_ref, w2_ref, b2_ref,
                    o_ref, *, g, obs_dim, embed_dim, latent_dim):
    """One batch tile.  Packed row i, lane-group j holds original batch row
    g*i + j; its obs/embed/out live in lane slice j of the packed refs."""
    w1a = w1a_ref[...]
    w1b = w1b_ref[...]
    b1 = b1_ref[...]
    w2 = w2_ref[...]
    b2 = b2_ref[...]
    for j in range(g):
        ob = obs_ref[:, j * obs_dim:(j + 1) * obs_dim]
        em = emb_ref[:, j * embed_dim:(j + 1) * embed_dim]
        # Layer 1: two MXU matmuls (split W1 replaces the concat), f32 accum;
        # bias + ReLU on the VPU in f32.
        h = jnp.dot(ob, w1a, preferred_element_type=jnp.float32)
        h = h + jnp.dot(em, w1b, preferred_element_type=jnp.float32)
        h = jnp.maximum(h + b1, 0.0)
        # Layer 2: hidden -> latent on the MXU, f32 accum, f32 bias add.
        y = jnp.dot(h.astype(w2.dtype), w2,
                    preferred_element_type=jnp.float32) + b2
        o_ref[:, j * latent_dim:(j + 1) * latent_dim] = y.astype(o_ref.dtype)


def _round_up(x, m):
    return ((x + m - 1) // m) * m


def _pack_factor(latent_dim, batch):
    """Rows packed per lane-row so the output last dim is exactly 128."""
    if latent_dim >= 128 or 128 % latent_dim != 0:
        return 1
    g = 128 // latent_dim
    return g if batch % g == 0 else 1


def _pick_tile(rows, g):
    """Tile size in packed rows.  Targets ~4096 original rows per tile
    (amortizes the ~0.35us grid-step cost; ~4-8 MiB VMEM incl. double
    buffers), keeps >= 2 tiles when possible (v7x has 2 TensorCores), and
    stays a multiple of 16 (sublane-safe for f32 and bf16) unless the whole
    batch fits in one small tile."""
    ceiling = max(16, 4096 // g)
    if rows <= 16:
        return rows
    half = pl.cdiv(rows, 2)
    return min(ceiling, _round_up(half, 16))


def encoder_forward(obs, embed, w1_obs, w1_emb, b1, w2, b2, *,
                    use_bf16=False, tile=None):
    """Encoder MLP hot path in Pallas.  Returns [B, latent_dim] float32."""
    B, obs_dim = obs.shape
    _, embed_dim = embed.shape
    hidden = w1_obs.shape[1]
    latent_dim = w2.shape[1]

    in_dtype = jnp.bfloat16 if use_bf16 else jnp.float32

    g = _pack_factor(latent_dim, B)
    rows = B // g
    tp = _pick_tile(rows, g) if tile is None else tile
    grid = (pl.cdiv(rows, tp),)

    # Free row-major reshapes: [B, d] and [B//g, g*d] alias the same HBM bytes.
    obs_p = obs.reshape(rows, g * obs_dim).astype(in_dtype)
    emb_p = embed.reshape(rows, g * embed_dim).astype(in_dtype)
    w1a = w1_obs.astype(in_dtype)
    w1b = w1_emb.astype(in_dtype)
    w2c = w2.astype(in_dtype)
    b1c = b1.astype(jnp.float32)   # elementwise math stays f32 (v5e-safe)
    b2c = b2.astype(jnp.float32)

    itm = jnp.dtype(in_dtype).itemsize
    flops = 2 * B * ((obs_dim + embed_dim) * hidden + hidden * latent_dim)
    bytes_accessed = (
        B * (obs_dim + embed_dim) * itm                       # activations in
        + ((obs_dim + embed_dim) * hidden
           + hidden * latent_dim) * itm                       # weights
        + (hidden + latent_dim) * 4                           # biases
        + B * latent_dim * 4                                  # output
    )

    kernel = functools.partial(
        _encoder_kernel, g=g, obs_dim=obs_dim, embed_dim=embed_dim,
        latent_dim=latent_dim)

    out_p = pl.pallas_call(
        kernel,
        out_shape=jax.ShapeDtypeStruct((rows, g * latent_dim), jnp.float32),
        grid_spec=pltpu.PrefetchScalarGridSpec(
            num_scalar_prefetch=0,
            grid=grid,
            in_specs=[
                pl.BlockSpec((tp, g * obs_dim), lambda i: (i, 0)),      # obs
                pl.BlockSpec((tp, g * embed_dim), lambda i: (i, 0)),    # embed
                pl.BlockSpec((obs_dim, hidden), lambda i: (0, 0)),      # W1a
                pl.BlockSpec((embed_dim, hidden), lambda i: (0, 0)),    # W1b
                pl.BlockSpec((1, hidden), lambda i: (0, 0)),            # b1
                pl.BlockSpec((hidden, latent_dim), lambda i: (0, 0)),   # W2
                pl.BlockSpec((1, latent_dim), lambda i: (0, 0)),        # b2
            ],
            out_specs=pl.BlockSpec((tp, g * latent_dim), lambda i: (i, 0)),
        ),
        compiler_params=pltpu.CompilerParams(
            dimension_semantics=("parallel",),
            vmem_limit_bytes=32 * 1024 * 1024,
        ),
        cost_estimate=pl.CostEstimate(
            flops=flops, transcendentals=0, bytes_accessed=bytes_accessed),
    )(obs_p, emb_p, w1a, w1b, b1c, w2c, b2c)

    # Free row-major reshape back to [B, latent_dim].
    return out_p.reshape(B, latent_dim)


def init_params(key, obs_dim, embed_dim, latent_dim, hidden=256):
    """orthogonal_init-style params (orthogonal weights, zero biases).
    Weights stored as [in, out] (transpose of PyTorch's [out, in]); W1 is
    pre-split along its input dim into the obs / embed halves."""
    k1, k2 = jax.random.split(key, 2)
    ortho = jax.nn.initializers.orthogonal()
    w1 = ortho(k1, (obs_dim + embed_dim, hidden), jnp.float32)
    w1_obs, w1_emb = w1[:obs_dim], w1[obs_dim:]
    b1 = jnp.zeros((1, hidden), jnp.float32)
    w2 = ortho(k2, (hidden, latent_dim), jnp.float32)
    b2 = jnp.zeros((1, latent_dim), jnp.float32)
    return w1_obs, w1_emb, b1, w2, b2


def _reference(obs, embed, w1_obs, w1_emb, b1, w2, b2):
    x = jnp.concatenate([obs, embed], axis=-1)
    w1 = jnp.concatenate([w1_obs, w1_emb], axis=0)
    h = jnp.maximum(jnp.dot(x, w1, precision="highest") + b1, 0.0)
    return jnp.dot(h, w2, precision="highest") + b2


if __name__ == "__main__":
    key = jax.random.PRNGKey(0)

    def run_case(B, obs_dim, embed_dim, latent_dim, use_bf16, tol):
        kk = jax.random.fold_in(key, B * 1000 + latent_dim)
        ko, ke, kp = jax.random.split(kk, 3)
        obs = jax.random.normal(ko, (B, obs_dim), jnp.float32)
        embed = jax.random.normal(ke, (B, embed_dim), jnp.float32)
        params = init_params(kp, obs_dim, embed_dim, latent_dim)
        y = jax.block_until_ready(
            encoder_forward(obs, embed, *params, use_bf16=use_bf16))
        ref = _reference(obs, embed, *params)
        assert y.shape == (B, latent_dim)
        assert jnp.allclose(y, ref, atol=tol, rtol=tol), (
            f"mismatch B={B} latent={latent_dim} bf16={use_bf16} "
            f"max_err={jnp.max(jnp.abs(y - ref))}")

    # 1) Small batch, lane-packed output path (g=4), single tile.
    run_case(B=8, obs_dim=32, embed_dim=32, latent_dim=32,
             use_bf16=False, tol=2e-4)
    # 2) Multi-tile grid with a partial tail tile (B not divisible by tile).
    run_case(B=200, obs_dim=32, embed_dim=32, latent_dim=32,
             use_bf16=False, tol=2e-4)
    # 3) bf16 inputs/weights (v6e/v7x option); f32 accumulation + elementwise.
    run_case(B=256, obs_dim=32, embed_dim=32, latent_dim=32,
             use_bf16=True, tol=5e-2)
    # 4) latent_dim that does not divide 128 -> unpacked fallback path (g=1).
    run_case(B=16, obs_dim=24, embed_dim=24, latent_dim=40,
             use_bf16=False, tol=2e-4)

    print("KERNEL_OK")
</pallas_src>

<mosaic_0001>
module attributes {stable_mosaic.version = 11 : i64} {
  func.func @_encoder_kernel(%arg0: i32, %arg1: memref<2x128xf32, #tpu.memory_space<vmem>>, %arg2: memref<2x128xf32, #tpu.memory_space<vmem>>, %arg3: memref<32x256xf32, #tpu.memory_space<vmem>>, %arg4: memref<32x256xf32, #tpu.memory_space<vmem>>, %arg5: memref<1x256xf32, #tpu.memory_space<vmem>>, %arg6: memref<256x32xf32, #tpu.memory_space<vmem>>, %arg7: memref<1x32xf32, #tpu.memory_space<vmem>>, %arg8: memref<2x128xf32, #tpu.memory_space<vmem>>) attributes {dimension_semantics = [#tpu.dimension_semantics<parallel>], iteration_bounds = array<i64: 1>, scalar_prefetch = 0 : i64, scratch_operands = 0 : i64, tpu.core_type = #tpu.core_type<tc>, window_params = [{transform_indices = @transform_0, window_bounds = array<i64: 2, 128>}, {transform_indices = @transform_1, window_bounds = array<i64: 2, 128>}, {pipeline_mode = #tpu.pipeline_mode<synchronous>, transform_indices = @transform_2, window_bounds = array<i64: 32, 256>}, {pipeline_mode = #tpu.pipeline_mode<synchronous>, transform_indices = @transform_3, window_bounds = array<i64: 32, 256>}, {pipeline_mode = #tpu.pipeline_mode<synchronous>, transform_indices = @transform_4, window_bounds = array<i64: 1, 256>}, {pipeline_mode = #tpu.pipeline_mode<synchronous>, transform_indices = @transform_5, window_bounds = array<i64: 256, 32>}, {pipeline_mode = #tpu.pipeline_mode<synchronous>, transform_indices = @transform_6, window_bounds = array<i64: 1, 32>}, {transform_indices = @transform_7, window_bounds = array<i64: 2, 128>}]} {
    %c0 = arith.constant 0 : index
    %c0_0 = arith.constant 0 : index
    %0 = vector.load %arg3[%c0, %c0_0] : memref<32x256xf32, #tpu.memory_space<vmem>>, vector<32x256xf32>
    %c0_1 = arith.constant 0 : index
    %c0_2 = arith.constant 0 : index
    %1 = vector.load %arg4[%c0_1, %c0_2] : memref<32x256xf32, #tpu.memory_space<vmem>>, vector<32x256xf32>
    %c0_3 = arith.constant 0 : index
    %c0_4 = arith.constant 0 : index
    %2 = vector.load %arg5[%c0_3, %c0_4] : memref<1x256xf32, #tpu.memory_space<vmem>>, vector<1x256xf32>
    %c0_5 = arith.constant 0 : index
    %c0_6 = arith.constant 0 : index
    %3 = vector.load %arg6[%c0_5, %c0_6] : memref<256x32xf32, #tpu.memory_space<vmem>>, vector<256x32xf32>
    %c0_7 = arith.constant 0 : index
    %c0_8 = arith.constant 0 : index
    %4 = vector.load %arg7[%c0_7, %c0_8] : memref<1x32xf32, #tpu.memory_space<vmem>>, vector<1x32xf32>
    %c0_9 = arith.constant 0 : index
    %c0_10 = arith.constant 0 : index
    %5 = vector.load %arg1[%c0_9, %c0_10] : memref<2x128xf32, #tpu.memory_space<vmem>>, vector<2x32xf32>
    %c0_11 = arith.constant 0 : index
    %c0_12 = arith.constant 0 : index
    %6 = vector.load %arg2[%c0_11, %c0_12] : memref<2x128xf32, #tpu.memory_space<vmem>>, vector<2x32xf32>
    %cst = arith.constant dense<0.000000e+00> : vector<2x256xf32>
    %7 = tpu.matmul %5, %0, %cst {dimension_numbers = #tpu.dot_dimension_numbers<[1], [0], [0], [1], [0, 0, 1, 1], [], []>} : vector<2x32xf32>, vector<32x256xf32>, vector<2x256xf32> -> vector<2x256xf32>
    %cst_13 = arith.constant dense<0.000000e+00> : vector<2x256xf32>
    %8 = tpu.matmul %6, %1, %cst_13 {dimension_numbers = #tpu.dot_dimension_numbers<[1], [0], [0], [1], [0, 0, 1, 1], [], []>} : vector<2x32xf32>, vector<32x256xf32>, vector<2x256xf32> -> vector<2x256xf32>
    %9 = arith.addf %7, %8 : vector<2x256xf32>
    %10 = vector.broadcast %2 : vector<1x256xf32> to vector<2x256xf32>
    %11 = arith.addf %9, %10 : vector<2x256xf32>
    %cst_14 = arith.constant 0.000000e+00 : f32
    %12 = vector.broadcast %cst_14 : f32 to vector<2x256xf32>
    %13 = arith.maximumf %11, %12 : vector<2x256xf32>
    %cst_15 = arith.constant dense<0.000000e+00> : vector<2x32xf32>
    %14 = tpu.matmul %13, %3, %cst_15 {dimension_numbers = #tpu.dot_dimension_numbers<[1], [0], [0], [1], [0, 0, 1, 1], [], []>} : vector<2x256xf32>, vector<256x32xf32>, vector<2x32xf32> -> vector<2x32xf32>
    %15 = vector.broadcast %4 : vector<1x32xf32> to vector<2x32xf32>
    %16 = arith.addf %14, %15 : vector<2x32xf32>
    %c0_16 = arith.constant 0 : index
    %c0_17 = arith.constant 0 : index
    %17 = vector.load %arg8[%c0_16, %c0_17] : memref<2x128xf32, #tpu.memory_space<vmem>>, vector<2x32xf32>
    tpu.vector_store %arg8[%c0_16, %c0_17], %16 {strides = array<i32>} : memref<2x128xf32, #tpu.memory_space<vmem>>, vector<2x32xf32>,
    %c0_18 = arith.constant 0 : index
    %c32 = arith.constant 32 : index
    %18 = vector.load %arg1[%c0_18, %c32] : memref<2x128xf32, #tpu.memory_space<vmem>>, vector<2x32xf32>
    %c0_19 = arith.constant 0 : index
    %c32_20 = arith.constant 32 : index
    %19 = vector.load %arg2[%c0_19, %c32_20] : memref<2x128xf32, #tpu.memory_space<vmem>>, vector<2x32xf32>
    %cst_21 = arith.constant dense<0.000000e+00> : vector<2x256xf32>
    %20 = tpu.matmul %18, %0, %cst_21 {dimension_numbers = #tpu.dot_dimension_numbers<[1], [0], [0], [1], [0, 0, 1, 1], [], []>} : vector<2x32xf32>, vector<32x256xf32>, vector<2x256xf32> -> vector<2x256xf32>
    %cst_22 = arith.constant dense<0.000000e+00> : vector<2x256xf32>
    %21 = tpu.matmul %19, %1, %cst_22 {dimension_numbers = #tpu.dot_dimension_numbers<[1], [0], [0], [1], [0, 0, 1, 1], [], []>} : vector<2x32xf32>, vector<32x256xf32>, vector<2x256xf32> -> vector<2x256xf32>
    %22 = arith.addf %20, %21 : vector<2x256xf32>
    %23 = vector.broadcast %2 : vector<1x256xf32> to vector<2x256xf32>
    %24 = arith.addf %22, %23 : vector<2x256xf32>
    %cst_23 = arith.constant 0.000000e+00 : f32
    %25 = vector.broadcast %cst_23 : f32 to vector<2x256xf32>
    %26 = arith.maximumf %24, %25 : vector<2x256xf32>
    %cst_24 = arith.constant dense<0.000000e+00> : vector<2x32xf32>
    %27 = tpu.matmul %26, %3, %cst_24 {dimension_numbers = #tpu.dot_dimension_numbers<[1], [0], [0], [1], [0, 0, 1, 1], [], []>} : vector<2x256xf32>, vector<256x32xf32>, vector<2x32xf32> -> vector<2x32xf32>
    %28 = vector.broadcast %4 : vector<1x32xf32> to vector<2x32xf32>
    %29 = arith.addf %27, %28 : vector<2x32xf32>
    %c0_25 = arith.constant 0 : index
    %c32_26 = arith.constant 32 : index
    %30 = vector.load %arg8[%c0_25, %c32_26] : memref<2x128xf32, #tpu.memory_space<vmem>>, vector<2x32xf32>
    tpu.vector_store %arg8[%c0_25, %c32_26], %29 {strides = array<i32>} : memref<2x128xf32, #tpu.memory_space<vmem>>, vector<2x32xf32>,
    %c0_27 = arith.constant 0 : index
    %c64 = arith.constant 64 : index
    %31 = vector.load %arg1[%c0_27, %c64] : memref<2x128xf32, #tpu.memory_space<vmem>>, vector<2x32xf32>
    %c0_28 = arith.constant 0 : index
    %c64_29 = arith.constant 64 : index
    %32 = vector.load %arg2[%c0_28, %c64_29] : memref<2x128xf32, #tpu.memory_space<vmem>>, vector<2x32xf32>
    %cst_30 = arith.constant dense<0.000000e+00> : vector<2x256xf32>
    %33 = tpu.matmul %31, %0, %cst_30 {dimension_numbers = #tpu.dot_dimension_numbers<[1], [0], [0], [1], [0, 0, 1, 1], [], []>} : vector<2x32xf32>, vector<32x256xf32>, vector<2x256xf32> -> vector<2x256xf32>
    %cst_31 = arith.constant dense<0.000000e+00> : vector<2x256xf32>
    %34 = tpu.matmul %32, %1, %cst_31 {dimension_numbers = #tpu.dot_dimension_numbers<[1], [0], [0], [1], [0, 0, 1, 1], [], []>} : vector<2x32xf32>, vector<32x256xf32>, vector<2x256xf32> -> vector<2x256xf32>
    %35 = arith.addf %33, %34 : vector<2x256xf32>
    %36 = vector.broadcast %2 : vector<1x256xf32> to vector<2x256xf32>
    %37 = arith.addf %35, %36 : vector<2x256xf32>
    %cst_32 = arith.constant 0.000000e+00 : f32
    %38 = vector.broadcast %cst_32 : f32 to vector<2x256xf32>
    %39 = arith.maximumf %37, %38 : vector<2x256xf32>
    %cst_33 = arith.constant dense<0.000000e+00> : vector<2x32xf32>
    %40 = tpu.matmul %39, %3, %cst_33 {dimension_numbers = #tpu.dot_dimension_numbers<[1], [0], [0], [1], [0, 0, 1, 1], [], []>} : vector<2x256xf32>, vector<256x32xf32>, vector<2x32xf32> -> vector<2x32xf32>
    %41 = vector.broadcast %4 : vector<1x32xf32> to vector<2x32xf32>
    %42 = arith.addf %40, %41 : vector<2x32xf32>
    %c0_34 = arith.constant 0 : index
    %c64_35 = arith.constant 64 : index
    %43 = vector.load %arg8[%c0_34, %c64_35] : memref<2x128xf32, #tpu.memory_space<vmem>>, vector<2x32xf32>
    tpu.vector_store %arg8[%c0_34, %c64_35], %42 {strides = array<i32>} : memref<2x128xf32, #tpu.memory_space<vmem>>, vector<2x32xf32>,
    %c0_36 = arith.constant 0 : index
    %c96 = arith.constant 96 : index
    %44 = vector.load %arg1[%c0_36, %c96] : memref<2x128xf32, #tpu.memory_space<vmem>>, vector<2x32xf32>
    %c0_37 = arith.constant 0 : index
    %c96_38 = arith.constant 96 : index
    %45 = vector.load %arg2[%c0_37, %c96_38] : memref<2x128xf32, #tpu.memory_space<vmem>>, vector<2x32xf32>
    %cst_39 = arith.constant dense<0.000000e+00> : vector<2x256xf32>
    %46 = tpu.matmul %44, %0, %cst_39 {dimension_numbers = #tpu.dot_dimension_numbers<[1], [0], [0], [1], [0, 0, 1, 1], [], []>} : vector<2x32xf32>, vector<32x256xf32>, vector<2x256xf32> -> vector<2x256xf32>
    %cst_40 = arith.constant dense<0.000000e+00> : vector<2x256xf32>
    %47 = tpu.matmul %45, %1, %cst_40 {dimension_numbers = #tpu.dot_dimension_numbers<[1], [0], [0], [1], [0, 0, 1, 1], [], []>} : vector<2x32xf32>, vector<32x256xf32>, vector<2x256xf32> -> vector<2x256xf32>
    %48 = arith.addf %46, %47 : vector<2x256xf32>
    %49 = vector.broadcast %2 : vector<1x256xf32> to vector<2x256xf32>
    %50 = arith.addf %48, %49 : vector<2x256xf32>
    %cst_41 = arith.constant 0.000000e+00 : f32
    %51 = vector.broadcast %cst_41 : f32 to vector<2x256xf32>
    %52 = arith.maximumf %50, %51 : vector<2x256xf32>
    %cst_42 = arith.constant dense<0.000000e+00> : vector<2x32xf32>
    %53 = tpu.matmul %52, %3, %cst_42 {dimension_numbers = #tpu.dot_dimension_numbers<[1], [0], [0], [1], [0, 0, 1, 1], [], []>} : vector<2x256xf32>, vector<256x32xf32>, vector<2x32xf32> -> vector<2x32xf32>
    %54 = vector.broadcast %4 : vector<1x32xf32> to vector<2x32xf32>
    %55 = arith.addf %53, %54 : vector<2x32xf32>
    %c0_43 = arith.constant 0 : index
    %c96_44 = arith.constant 96 : index
    %56 = vector.load %arg8[%c0_43, %c96_44] : memref<2x128xf32, #tpu.memory_space<vmem>>, vector<2x32xf32>
    tpu.vector_store %arg8[%c0_43, %c96_44], %55 {strides = array<i32>} : memref<2x128xf32, #tpu.memory_space<vmem>>, vector<2x32xf32>,
    return
  }
  func.func @transform_0(%arg0: i32) -> (i32, i32) {
    %c0_i32 = arith.constant 0 : i32
    %c0_i32_0 = arith.constant 0 : i32
    return %arg0, %c0_i32 : i32, i32
  }
  func.func @transform_1(%arg0: i32) -> (i32, i32) {
    %c0_i32 = arith.constant 0 : i32
    %c0_i32_0 = arith.constant 0 : i32
    return %arg0, %c0_i32 : i32, i32
  }
  func.func @transform_2(%arg0: i32) -> (i32, i32) {
    %c0_i32 = arith.constant 0 : i32
    %c0_i32_0 = arith.constant 0 : i32
    %c0_i32_1 = arith.constant 0 : i32
    return %c0_i32, %c0_i32_0 : i32, i32
  }
  func.func @transform_3(%arg0: i32) -> (i32, i32) {
    %c0_i32 = arith.constant 0 : i32
    %c0_i32_0 = arith.constant 0 : i32
    %c0_i32_1 = arith.constant 0 : i32
    return %c0_i32, %c0_i32_0 : i32, i32
  }
  func.func @transform_4(%arg0: i32) -> (i32, i32) {
    %c0_i32 = arith.constant 0 : i32
    %c0_i32_0 = arith.constant 0 : i32
    %c0_i32_1 = arith.constant 0 : i32
    return %c0_i32, %c0_i32_0 : i32, i32
  }
  func.func @transform_5(%arg0: i32) -> (i32, i32) {
    %c0_i32 = arith.constant 0 : i32
    %c0_i32_0 = arith.constant 0 : i32
    %c0_i32_1 = arith.constant 0 : i32
    return %c0_i32, %c0_i32_0 : i32, i32
  }
  func.func @transform_6(%arg0: i32) -> (i32, i32) {
    %c0_i32 = arith.constant 0 : i32
    %c0_i32_0 = arith.constant 0 : i32
    %c0_i32_1 = arith.constant 0 : i32
    return %c0_i32, %c0_i32_0 : i32, i32
  }
  func.func @transform_7(%arg0: i32) -> (i32, i32) {
    %c0_i32 = arith.constant 0 : i32
    %c0_i32_0 = arith.constant 0 : i32
    return %arg0, %c0_i32 : i32, i32
  }
}

</mosaic_0001>

<llo_original>
// kernel: tpu_custom_call.1
$region0: #{tpu_custom_call.1}
  #allocation0 [shape = 'u32[]', space=smem, size = 0x4, offset = 0x4, fixed_abs, tag = 'smem constant byte address 0x4 - core index']
  #allocation1 [shape = 'u32[72,128]{1,0:T(1,128)}', space=vmem, size = 0x9000, scoped, tag = 'internal scratch']
  %s0 = inlined_call_operand.vmem [shape: f32[2,128], index: 0, kind: input, shape index: {}]
  %s1 = inlined_call_operand.vmem [shape: f32[2,128], index: 1, kind: input, shape index: {}]
  %s2 = inlined_call_operand.vmem [shape: f32[32,256], index: 2, kind: input, shape index: {}]
  %s3 = inlined_call_operand.vmem [shape: f32[32,256], index: 3, kind: input, shape index: {}]
  %s4 = inlined_call_operand.vmem [shape: f32[1,256], index: 4, kind: input, shape index: {}]
  %s5 = inlined_call_operand.vmem [shape: f32[256,32], index: 5, kind: input, shape index: {}]
  %s6 = inlined_call_operand.vmem [shape: f32[1,32], index: 6, kind: input, shape index: {}]
  %s7 = inlined_call_operand.hbm [shape: f32[2,128], index: 7, kind: output, shape index: {}]
  %s8 = sld [smem:[#allocation0]]
  $region38: #{tpu_custom_call.1} parent=0
    _
  %s10 = ssub.s32 1, %s8
  %s11 = scalar_select 0, %s10, %s8
  $region1: #{tpu_custom_call.1} parent=0
    #allocation2 [shape = 'u8[1024]{0}', space=vmem, size = 0x400, scoped, tag = 'output window, operand 0, single buffered']
    #allocation3 [shape = 's32[1]{0}', space=sflag, size = 0x4, scoped, tag = 'scoped memory for tpu_custom_call.1']
    %12 = vsyncpa [#allocation3], 0
    // Predicated region
    $region2: #{tpu_custom_call.1} parent=1 // pred_check
      _
    $region3: #{tpu_custom_call.1} parent=1 // pred_check_branch
      %14 = sbr.rel (0) target = $region5
    $region4: #{tpu_custom_call.1} parent=1 // pred_region
      _
    $region5: #{tpu_custom_call.1} parent=1 // pred_fallthru
      _
    // Predicated region
    $region6: #{tpu_custom_call.1} parent=1 // pred_check
      _
    $region7: #{tpu_custom_call.1} parent=1 // pred_check_branch
      %16 = sbr.rel (0) target = $region9
    $region8: #{tpu_custom_call.1} parent=1 // pred_region
      _
    $region9: #{tpu_custom_call.1} parent=1 // pred_fallthru
      _
    // Predicated region
    $region10: #{tpu_custom_call.1} parent=1 // pred_check
      _
    $region11: #{tpu_custom_call.1} parent=1 // pred_check_branch
      %18 = sbr.rel (0) target = $region13
    $region12: #{tpu_custom_call.1} parent=1 // pred_region
      _
    $region13: #{tpu_custom_call.1} parent=1 // pred_fallthru
      _
    // Predicated region
    $region14: #{tpu_custom_call.1} parent=1 // pred_check
      _
    $region15: #{tpu_custom_call.1} parent=1 // pred_check_branch
      %20 = sbr.rel (0) target = $region17
    $region16: #{tpu_custom_call.1} parent=1 // pred_region
      _
    $region17: #{tpu_custom_call.1} parent=1 // pred_fallthru
      _
    // Predicated region
    $region18: #{tpu_custom_call.1} parent=1 // pred_check
      _
    $region19: #{tpu_custom_call.1} parent=1 // pred_check_branch
      %22 = sbr.rel (0) target = $region21
    $region20: #{tpu_custom_call.1} parent=1 // pred_region
      _
    $region21: #{tpu_custom_call.1} parent=1 // pred_fallthru
      _
    // Predicated region
    $region22: #{tpu_custom_call.1} parent=1 // pred_check
      _
    $region23: #{tpu_custom_call.1} parent=1 // pred_check_branch
      %24 = sbr.rel (0) target = $region25
    $region24: #{tpu_custom_call.1} parent=1 // pred_region
      _
    $region25: #{tpu_custom_call.1} parent=1 // pred_fallthru
      _
    // Predicated region
    $region26: #{tpu_custom_call.1} parent=1 // pred_check
      _
    $region27: #{tpu_custom_call.1} parent=1 // pred_check_branch
      %26 = sbr.rel (0) target = $region29
    $region28: #{tpu_custom_call.1} parent=1 // pred_region
      _
    $region29: #{tpu_custom_call.1} parent=1 // pred_fallthru
      _
    %v27 = vld [vmem:[%s2] sm:$0xff]
    %v28 = vld [vmem:[%s2 + $0x8] sm:$0xff]
    %v29 = vld [vmem:[%s2 + $0x10] sm:$0xff]
    %v30 = vld [vmem:[%s2 + $0x18] sm:$0xff]
    %v31 = vld [vmem:[%s2 + $0x20] sm:$0xff]
    %v32 = vld [vmem:[%s2 + $0x28] sm:$0xff]
    %v33 = vld [vmem:[%s2 + $0x30] sm:$0xff]
    %v34 = vld [vmem:[%s2 + $0x38] sm:$0xff]
    %v35 = vld [vmem:[%s3] sm:$0xff]
    %v36 = vld [vmem:[%s3 + $0x8] sm:$0xff]
    %v37 = vld [vmem:[%s3 + $0x10] sm:$0xff]
    %v38 = vld [vmem:[%s3 + $0x18] sm:$0xff]
    %v39 = vld [vmem:[%s3 + $0x20] sm:$0xff]
    %v40 = vld [vmem:[%s3 + $0x28] sm:$0xff]
    %v41 = vld [vmem:[%s3 + $0x30] sm:$0xff]
    %v42 = vld [vmem:[%s3 + $0x38] sm:$0xff]
    %v43 = vld [vmem:[%s4] sm:$0x3]
    %v44 = vld [vmem:[%s5] sm:$0xff]
    %v45 = vld [vmem:[%s5 + $0x8] sm:$0xff]
    %v46 = vld [vmem:[%s5 + $0x10] sm:$0xff]
    %v47 = vld [vmem:[%s5 + $0x18] sm:$0xff]
    %v48 = vld [vmem:[%s5 + $0x20] sm:$0xff]
    %v49 = vld [vmem:[%s5 + $0x28] sm:$0xff]
    %v50 = vld [vmem:[%s5 + $0x30] sm:$0xff]
    %v51 = vld [vmem:[%s5 + $0x38] sm:$0xff]
    %v52 = vld [vmem:[%s5 + $0x40] sm:$0xff]
    %v53 = vld [vmem:[%s5 + $0x48] sm:$0xff]
    %v54 = vld [vmem:[%s5 + $0x50] sm:$0xff]
    %v55 = vld [vmem:[%s5 + $0x58] sm:$0xff]
    %v56 = vld [vmem:[%s5 + $0x60] sm:$0xff]
    %v57 = vld [vmem:[%s5 + $0x68] sm:$0xff]
    %v58 = vld [vmem:[%s5 + $0x70] sm:$0xff]
    %v59 = vld [vmem:[%s5 + $0x78] sm:$0xff]
    %v60 = vld [vmem:[%s5 + $0x80] sm:$0xff]
    %v61 = vld [vmem:[%s5 + $0x88] sm:$0xff]
    %v62 = vld [vmem:[%s5 + $0x90] sm:$0xff]
    %v63 = vld [vmem:[%s5 + $0x98] sm:$0xff]
    %v64 = vld [vmem:[%s5 + $0xa0] sm:$0xff]
    %v65 = vld [vmem:[%s5 + $0xa8] sm:$0xff]
    %v66 = vld [vmem:[%s5 + $0xb0] sm:$0xff]
    %v67 = vld [vmem:[%s5 + $0xb8] sm:$0xff]
    %v68 = vld [vmem:[%s5 + $0xc0] sm:$0xff]
    %v69 = vld [vmem:[%s5 + $0xc8] sm:$0xff]
    %v70 = vld [vmem:[%s5 + $0xd0] sm:$0xff]
    %v71 = vld [vmem:[%s5 + $0xd8] sm:$0xff]
    %v72 = vld [vmem:[%s5 + $0xe0] sm:$0xff]
    %v73 = vld [vmem:[%s5 + $0xe8] sm:$0xff]
    %v74 = vld [vmem:[%s5 + $0xf0] sm:$0xff]
    %v75 = vld [vmem:[%s5 + $0xf8] sm:$0xff]
    %v76 = vld [vmem:[%s6] sm:$0x1]
    %v77 = vld [vmem:[%s0] sm:$0x3]
    %v78 = vld [vmem:[%s1] sm:$0x3]
    %vm79 = vcmask 261120
    %v81 = vsel %vm79, %v78, 0
    %83 = vmatpush.msra.mxu0 0.0
    %84 = vmatpush.msra.mxu0 0.0
    %85 = vmatpush.msra.mxu0 0.0
    %86 = vmatpush.msra.mxu0 0.0
    %87 = vmatpush.msra.mxu0 0.0
    %88 = vmatpush.msra.mxu0 0.0
    %89 = vmatpush.msra.mxu0 0.0
    %90 = vmatpush.msra.mxu0 0.0
    %91 = vmatpush.msra.mxu0 0.0
    %92 = vmatpush.msra.mxu0 0.0
    %93 = vmatpush.msra.mxu0 0.0
    %94 = vmatpush.msra.mxu0 0.0
    %95 = vmatpush.msra.mxu0 %v41
    %96 = vmatpush.msra.mxu0 %v39
    %97 = vmatpush.msra.mxu0 %v37
    %98 = vmatpush.msra.mxu0 %v35
    %99 = vmatmul.f32.gmra.mxu0 %v81
    %v100 = vpop.f32.mrf.mxu0
    %v101 = vadd.f32 0.0, %v100
    %102 = vdwg.mxu0
    %103 = vmatpush.msra.mxu0 0.0
    %104 = vmatpush.msra.mxu0 0.0
    %105 = vmatpush.msra.mxu0 0.0
    %106 = vmatpush.msra.mxu0 0.0
    %107 = vmatpush.msra.mxu0 0.0
    %108 = vmatpush.msra.mxu0 0.0
    %109 = vmatpush.msra.mxu0 0.0
    %110 = vmatpush.msra.mxu0 0.0
    %111 = vmatpush.msra.mxu0 0.0
    %112 = vmatpush.msra.mxu0 0.0
    %113 = vmatpush.msra.mxu0 0.0
    %114 = vmatpush.msra.mxu0 0.0
    %115 = vmatpush.msra.mxu0 %v42
    %116 = vmatpush.msra.mxu0 %v40
    %117 = vmatpush.msra.mxu0 %v38
    %118 = vmatpush.msra.mxu0 %v36
    %119 = vmatmul.f32.gmra.mxu0 %v81
    %v120 = vpop.f32.mrf.mxu0
    %v121 = vadd.f32 0.0, %v120
    %122 = vdwg.mxu0
    %v124 = vsel %vm79, %v77, 0
    %126 = vmatpush.msra.mxu0 0.0
    %127 = vmatpush.msra.mxu0 0.0
    %128 = vmatpush.msra.mxu0 0.0
    %129 = vmatpush.msra.mxu0 0.0
    %130 = vmatpush.msra.mxu0 0.0
    %131 = vmatpush.msra.mxu0 0.0
    %132 = vmatpush.msra.mxu0 0.0
    %133 = vmatpush.msra.mxu0 0.0
    %134 = vmatpush.msra.mxu0 0.0
    %135 = vmatpush.msra.mxu0 0.0
    %136 = vmatpush.msra.mxu0 0.0
    %137 = vmatpush.msra.mxu0 0.0
    %138 = vmatpush.msra.mxu0 %v33
    %139 = vmatpush.msra.mxu0 %v31
    %140 = vmatpush.msra.mxu0 %v29
    %141 = vmatpush.msra.mxu0 %v27
    %142 = vmatmul.f32.gmra.mxu0 %v124
    %v143 = vpop.f32.mrf.mxu0
    %v144 = vadd.f32 %v101, %v143
    %145 = vdwg.mxu0
    %146 = vmatpush.msra.mxu0 0.0
    %147 = vmatpush.msra.mxu0 0.0
    %148 = vmatpush.msra.mxu0 0.0
    %149 = vmatpush.msra.mxu0 0.0
    %150 = vmatpush.msra.mxu0 0.0
    %151 = vmatpush.msra.mxu0 0.0
    %152 = vmatpush.msra.mxu0 0.0
    %153 = vmatpush.msra.mxu0 0.0
    %154 = vmatpush.msra.mxu0 0.0
    %155 = vmatpush.msra.mxu0 0.0
    %156 = vmatpush.msra.mxu0 0.0
    %157 = vmatpush.msra.mxu0 0.0
    %158 = vmatpush.msra.mxu0 %v34
    %159 = vmatpush.msra.mxu0 %v32
    %160 = vmatpush.msra.mxu0 %v30
    %161 = vmatpush.msra.mxu0 %v28
    %162 = vmatmul.f32.gmra.mxu0 %v124
    %v163 = vpop.f32.mrf.mxu0
    %v164 = vadd.f32 %v121, %v163
    %165 = vdwg.mxu0
    %v167 = vperm.slane %v43, 0
    %v168 = vperm.slane %v43, 1
    %v171 = vadd.f32 %v144, %v167
    %v172 = vadd.f32 %v164, %v168
    %v173 = vmax.f32 %v171, 0.0
    %v174 = vmax.f32 %v172, 0.0
    %v176 = vperm.slane %v76, 0
    %178 = vmatpush.msra.mxu0 %v59
    %179 = vmatpush.msra.mxu0 %v58
    %180 = vmatpush.msra.mxu0 %v57
    %181 = vmatpush.msra.mxu0 %v56
    %182 = vmatpush.msra.mxu0 %v55
    %183 = vmatpush.msra.mxu0 %v54
    %184 = vmatpush.msra.mxu0 %v53
    %185 = vmatpush.msra.mxu0 %v52
    %186 = vmatpush.msra.mxu0 %v51
    %187 = vmatpush.msra.mxu0 %v50
    %188 = vmatpush.msra.mxu0 %v49
    %189 = vmatpush.msra.mxu0 %v48
    %190 = vmatpush.msra.mxu0 %v47
    %191 = vmatpush.msra.mxu0 %v46
    %192 = vmatpush.msra.mxu0 %v45
    %193 = vmatpush.msra.mxu0 %v44
    %194 = vmatmul.f32.gmra.mxu0 %v173
    %v195 = vpop.f32.mrf.mxu0
    %v196 = vadd.f32 %v176, %v195
    %197 = vdwg.mxu0
    %198 = vmatpush.msra.mxu0 %v75
    %199 = vmatpush.msra.mxu0 %v74
    %200 = vmatpush.msra.mxu0 %v73
    %201 = vmatpush.msra.mxu0 %v72
    %202 = vmatpush.msra.mxu0 %v71
    %203 = vmatpush.msra.mxu0 %v70
    %204 = vmatpush.msra.mxu0 %v69
    %205 = vmatpush.msra.mxu0 %v68
    %206 = vmatpush.msra.mxu0 %v67
    %207 = vmatpush.msra.mxu0 %v66
    %208 = vmatpush.msra.mxu0 %v65
    %209 = vmatpush.msra.mxu0 %v64
    %210 = vmatpush.msra.mxu0 %v63
    %211 = vmatpush.msra.mxu0 %v62
    %212 = vmatpush.msra.mxu0 %v61
    %213 = vmatpush.msra.mxu0 %v60
    %214 = vmatmul.f32.gmra.mxu0 %v174
    %v215 = vpop.f32.mrf.mxu0
    %v216 = vadd.f32 %v196, %v215
    %217 = vdwg.mxu0
    %vm218 = vcmask 254976
    %219 = vst.msk [vmem:[#allocation2] sm:$0x3] %vm218, %v216
    %v220 = vld [vmem:[%s0] sm:$0x3]
    %v221 = vld [vmem:[%s1] sm:$0x3]
    %223 = vrot.lane.b32.xlu0 %v221, 96
    %v224 = vpop.permute.xlu0 %223
    %v225 = vsel %vm79, %v224, 0
    %227 = vmatpush.msra.mxu0 0.0
    %228 = vmatpush.msra.mxu0 0.0
    %229 = vmatpush.msra.mxu0 0.0
    %230 = vmatpush.msra.mxu0 0.0
    %231 = vmatpush.msra.mxu0 0.0
    %232 = vmatpush.msra.mxu0 0.0
    %233 = vmatpush.msra.mxu0 0.0
    %234 = vmatpush.msra.mxu0 0.0
    %235 = vmatpush.msra.mxu0 0.0
    %236 = vmatpush.msra.mxu0 0.0
    %237 = vmatpush.msra.mxu0 0.0
    %238 = vmatpush.msra.mxu0 0.0
    %239 = vmatpush.msra.mxu0 %v41
    %240 = vmatpush.msra.mxu0 %v39
    %241 = vmatpush.msra.mxu0 %v37
    %242 = vmatpush.msra.mxu0 %v35
    %243 = vmatmul.f32.gmra.mxu0 %v225
    %v244 = vpop.f32.mrf.mxu0
    %v245 = vadd.f32 0.0, %v244
    %246 = vdwg.mxu0
    %247 = vmatpush.msra.mxu0 0.0
    %248 = vmatpush.msra.mxu0 0.0
    %249 = vmatpush.msra.mxu0 0.0
    %250 = vmatpush.msra.mxu0 0.0
    %251 = vmatpush.msra.mxu0 0.0
    %252 = vmatpush.msra.mxu0 0.0
    %253 = vmatpush.msra.mxu0 0.0
    %254 = vmatpush.msra.mxu0 0.0
    %255 = vmatpush.msra.mxu0 0.0
    %256 = vmatpush.msra.mxu0 0.0
    %257 = vmatpush.msra.mxu0 0.0
    %258 = vmatpush.msra.mxu0 0.0
    %259 = vmatpush.msra.mxu0 %v42
    %260 = vmatpush.msra.mxu0 %v40
    %261 = vmatpush.msra.mxu0 %v38
    %262 = vmatpush.msra.mxu0 %v36
    %263 = vmatmul.f32.gmra.mxu0 %v225
    %v264 = vpop.f32.mrf.mxu0
    %v265 = vadd.f32 0.0, %v264
    %266 = vdwg.mxu0
    %268 = vrot.lane.b32.xlu0 %v220, 96
    %v269 = vpop.permute.xlu0 %268
    %v270 = vsel %vm79, %v269, 0
    %272 = vmatpush.msra.mxu0 0.0
    %273 = vmatpush.msra.mxu0 0.0
    %274 = vmatpush.msra.mxu0 0.0
    %275 = vmatpush.msra.mxu0 0.0
    %276 = vmatpush.msra.mxu0 0.0
    %277 = vmatpush.msra.mxu0 0.0
    %278 = vmatpush.msra.mxu0 0.0
    %279 = vmatpush.msra.mxu0 0.0
    %280 = vmatpush.msra.mxu0 0.0
    %281 = vmatpush.msra.mxu0 0.0
    %282 = vmatpush.msra.mxu0 0.0
    %283 = vmatpush.msra.mxu0 0.0
    %284 = vmatpush.msra.mxu0 %v33
    %285 = vmatpush.msra.mxu0 %v31
    %286 = vmatpush.msra.mxu0 %v29
    %287 = vmatpush.msra.mxu0 %v27
    %288 = vmatmul.f32.gmra.mxu0 %v270
    %v289 = vpop.f32.mrf.mxu0
    %v290 = vadd.f32 %v245, %v289
    %291 = vdwg.mxu0
    %292 = vmatpush.msra.mxu0 0.0
    %293 = vmatpush.msra.mxu0 0.0
    %294 = vmatpush.msra.mxu0 0.0
    %295 = vmatpush.msra.mxu0 0.0
    %296 = vmatpush.msra.mxu0 0.0
    %297 = vmatpush.msra.mxu0 0.0
    %298 = vmatpush.msra.mxu0 0.0
    %299 = vmatpush.msra.mxu0 0.0
    %300 = vmatpush.msra.mxu0 0.0
    %301 = vmatpush.msra.mxu0 0.0
    %302 = vmatpush.msra.mxu0 0.0
    %303 = vmatpush.msra.mxu0 0.0
    %304 = vmatpush.msra.mxu0 %v34
    %305 = vmatpush.msra.mxu0 %v32
    %306 = vmatpush.msra.mxu0 %v30
    %307 = vmatpush.msra.mxu0 %v28
    %308 = vmatmul.f32.gmra.mxu0 %v270
    %v309 = vpop.f32.mrf.mxu0
    %v310 = vadd.f32 %v265, %v309
    %311 = vdwg.mxu0
    %v312 = vadd.f32 %v290, %v167
    %v313 = vadd.f32 %v310, %v168
    %v314 = vmax.f32 %v312, 0.0
    %v315 = vmax.f32 %v313, 0.0
    %316 = vmatpush.msra.mxu0 %v59
    %317 = vmatpush.msra.mxu0 %v58
    %318 = vmatpush.msra.mxu0 %v57
    %319 = vmatpush.msra.mxu0 %v56
    %320 = vmatpush.msra.mxu0 %v55
    %321 = vmatpush.msra.mxu0 %v54
    %322 = vmatpush.msra.mxu0 %v53
    %323 = vmatpush.msra.mxu0 %v52
    %324 = vmatpush.msra.mxu0 %v51
    %325 = vmatpush.msra.mxu0 %v50
    %326 = vmatpush.msra.mxu0 %v49
    %327 = vmatpush.msra.mxu0 %v48
    %328 = vmatpush.msra.mxu0 %v47
    %329 = vmatpush.msra.mxu0 %v46
    %330 = vmatpush.msra.mxu0 %v45
    %331 = vmatpush.msra.mxu0 %v44
    %332 = vmatmul.f32.gmra.mxu0 %v314
    %v333 = vpop.f32.mrf.mxu0
    %v334 = vadd.f32 %v176, %v333
    %335 = vdwg.mxu0
    %336 = vmatpush.msra.mxu0 %v75
    %337 = vmatpush.msra.mxu0 %v74
    %338 = vmatpush.msra.mxu0 %v73
    %339 = vmatpush.msra.mxu0 %v72
    %340 = vmatpush.msra.mxu0 %v71
    %341 = vmatpush.msra.mxu0 %v70
    %342 = vmatpush.msra.mxu0 %v69
    %343 = vmatpush.msra.mxu0 %v68
    %344 = vmatpush.msra.mxu0 %v67
    %345 = vmatpush.msra.mxu0 %v66
    %346 = vmatpush.msra.mxu0 %v65
    %347 = vmatpush.msra.mxu0 %v64
    %348 = vmatpush.msra.mxu0 %v63
    %349 = vmatpush.msra.mxu0 %v62
    %350 = vmatpush.msra.mxu0 %v61
    %351 = vmatpush.msra.mxu0 %v60
    %352 = vmatmul.f32.gmra.mxu0 %v315
    %v353 = vpop.f32.mrf.mxu0
    %v354 = vadd.f32 %v334, %v353
    %355 = vdwg.mxu0
    %357 = vrot.lane.b32.xlu0 %v354, 32
    %v358 = vpop.permute.xlu0 %357
    %vm360 = vcmask 517376
    %361 = vst.msk [vmem:[#allocation2] sm:$0x3] %vm360, %v358
    %v362 = vld [vmem:[%s0] sm:$0x3]
    %v363 = vld [vmem:[%s1] sm:$0x3]
    %365 = vrot.lane.b32.xlu0 %v363, 64
    %v366 = vpop.permute.xlu0 %365
    %v367 = vsel %vm79, %v366, 0
    %369 = vmatpush.msra.mxu0 0.0
    %370 = vmatpush.msra.mxu0 0.0
    %371 = vmatpush.msra.mxu0 0.0
    %372 = vmatpush.msra.mxu0 0.0
    %373 = vmatpush.msra.mxu0 0.0
    %374 = vmatpush.msra.mxu0 0.0
    %375 = vmatpush.msra.mxu0 0.0
    %376 = vmatpush.msra.mxu0 0.0
    %377 = vmatpush.msra.mxu0 0.0
    %378 = vmatpush.msra.mxu0 0.0
    %379 = vmatpush.msra.mxu0 0.0
    %380 = vmatpush.msra.mxu0 0.0
    %381 = vmatpush.msra.mxu0 %v41
    %382 = vmatpush.msra.mxu0 %v39
    %383 = vmatpush.msra.mxu0 %v37
    %384 = vmatpush.msra.mxu0 %v35
    %385 = vmatmul.f32.gmra.mxu0 %v367
    %v386 = vpop.f32.mrf.mxu0
    %v387 = vadd.f32 0.0, %v386
    %388 = vdwg.mxu0
    %389 = vmatpush.msra.mxu0 0.0
    %390 = vmatpush.msra.mxu0 0.0
    %391 = vmatpush.msra.mxu0 0.0
    %392 = vmatpush.msra.mxu0 0.0
    %393 = vmatpush.msra.mxu0 0.0
    %394 = vmatpush.msra.mxu0 0.0
    %395 = vmatpush.msra.mxu0 0.0
    %396 = vmatpush.msra.mxu0 0.0
    %397 = vmatpush.msra.mxu0 0.0
    %398 = vmatpush.msra.mxu0 0.0
    %399 = vmatpush.msra.mxu0 0.0
    %400 = vmatpush.msra.mxu0 0.0
    %401 = vmatpush.msra.mxu0 %v42
    %402 = vmatpush.msra.mxu0 %v40
    %403 = vmatpush.msra.mxu0 %v38
    %404 = vmatpush.msra.mxu0 %v36
    %405 = vmatmul.f32.gmra.mxu0 %v367
    %v406 = vpop.f32.mrf.mxu0
    %v407 = vadd.f32 0.0, %v406
    %408 = vdwg.mxu0
    %410 = vrot.lane.b32.xlu0 %v362, 64
    %v411 = vpop.permute.xlu0 %410
    %v412 = vsel %vm79, %v411, 0
    %414 = vmatpush.msra.mxu0 0.0
    %415 = vmatpush.msra.mxu0 0.0
    %416 = vmatpush.msra.mxu0 0.0
    %417 = vmatpush.msra.mxu0 0.0
    %418 = vmatpush.msra.mxu0 0.0
    %419 = vmatpush.msra.mxu0 0.0
    %420 = vmatpush.msra.mxu0 0.0
    %421 = vmatpush.msra.mxu0 0.0
    %422 = vmatpush.msra.mxu0 0.0
    %423 = vmatpush.msra.mxu0 0.0
    %424 = vmatpush.msra.mxu0 0.0
    %425 = vmatpush.msra.mxu0 0.0
    %426 = vmatpush.msra.mxu0 %v33
    %427 = vmatpush.msra.mxu0 %v31
    %428 = vmatpush.msra.mxu0 %v29
    %429 = vmatpush.msra.mxu0 %v27
    %430 = vmatmul.f32.gmra.mxu0 %v412
    %v431 = vpop.f32.mrf.mxu0
    %v432 = vadd.f32 %v387, %v431
    %433 = vdwg.mxu0
    %434 = vmatpush.msra.mxu0 0.0
    %435 = vmatpush.msra.mxu0 0.0
    %436 = vmatpush.msra.mxu0 0.0
    %437 = vmatpush.msra.mxu0 0.0
    %438 = vmatpush.msra.mxu0 0.0
    %439 = vmatpush.msra.mxu0 0.0
    %440 = vmatpush.msra.mxu0 0.0
    %441 = vmatpush.msra.mxu0 0.0
    %442 = vmatpush.msra.mxu0 0.0
    %443 = vmatpush.msra.mxu0 0.0
    %444 = vmatpush.msra.mxu0 0.0
    %445 = vmatpush.msra.mxu0 0.0
    %446 = vmatpush.msra.mxu0 %v34
    %447 = vmatpush.msra.mxu0 %v32
    %448 = vmatpush.msra.mxu0 %v30
    %449 = vmatpush.msra.mxu0 %v28
    %450 = vmatmul.f32.gmra.mxu0 %v412
    %v451 = vpop.f32.mrf.mxu0
    %v452 = vadd.f32 %v407, %v451
    %453 = vdwg.mxu0
    %v454 = vadd.f32 %v432, %v167
    %v455 = vadd.f32 %v452, %v168
    %v456 = vmax.f32 %v454, 0.0
    %v457 = vmax.f32 %v455, 0.0
    %458 = vmatpush.msra.mxu0 %v59
    %459 = vmatpush.msra.mxu0 %v58
    %460 = vmatpush.msra.mxu0 %v57
    %461 = vmatpush.msra.mxu0 %v56
    %462 = vmatpush.msra.mxu0 %v55
    %463 = vmatpush.msra.mxu0 %v54
    %464 = vmatpush.msra.mxu0 %v53
    %465 = vmatpush.msra.mxu0 %v52
    %466 = vmatpush.msra.mxu0 %v51
    %467 = vmatpush.msra.mxu0 %v50
    %468 = vmatpush.msra.mxu0 %v49
    %469 = vmatpush.msra.mxu0 %v48
    %470 = vmatpush.msra.mxu0 %v47
    %471 = vmatpush.msra.mxu0 %v46
    %472 = vmatpush.msra.mxu0 %v45
    %473 = vmatpush.msra.mxu0 %v44
    %474 = vmatmul.f32.gmra.mxu0 %v456
    %v475 = vpop.f32.mrf.mxu0
    %v476 = vadd.f32 %v176, %v475
    %477 = vdwg.mxu0
    %478 = vmatpush.msra.mxu0 %v75
    %479 = vmatpush.msra.mxu0 %v74
    %480 = vmatpush.msra.mxu0 %v73
    %481 = vmatpush.msra.mxu0 %v72
    %482 = vmatpush.msra.mxu0 %v71
    %483 = vmatpush.msra.mxu0 %v70
    %484 = vmatpush.msra.mxu0 %v69
    %485 = vmatpush.msra.mxu0 %v68
    %486 = vmatpush.msra.mxu0 %v67
    %487 = vmatpush.msra.mxu0 %v66
    %488 = vmatpush.msra.mxu0 %v65
    %489 = vmatpush.msra.mxu0 %v64
    %490 = vmatpush.msra.mxu0 %v63
    %491 = vmatpush.msra.mxu0 %v62
    %492 = vmatpush.msra.mxu0 %v61
    %493 = vmatpush.msra.mxu0 %v60
    %494 = vmatmul.f32.gmra.mxu0 %v457
    %v495 = vpop.f32.mrf.mxu0
    %v496 = vadd.f32 %v476, %v495
    %497 = vdwg.mxu0
    %499 = vrot.lane.b32.xlu0 %v496, 64
    %v500 = vpop.permute.xlu0 %499
    %vm502 = vcmask 779776
    %503 = vst.msk [vmem:[#allocation2] sm:$0x3] %vm502, %v500
    %v504 = vld [vmem:[%s0] sm:$0x3]
    %v505 = vld [vmem:[%s1] sm:$0x3]
    %507 = vrot.lane.b32.xlu0 %v505, 32
    %v508 = vpop.permute.xlu0 %507
    %v509 = vsel %vm79, %v508, 0
    %511 = vmatpush.msra.mxu0 0.0
    %512 = vmatpush.msra.mxu0 0.0
    %513 = vmatpush.msra.mxu0 0.0
    %514 = vmatpush.msra.mxu0 0.0
    %515 = vmatpush.msra.mxu0 0.0
    %516 = vmatpush.msra.mxu0 0.0
    %517 = vmatpush.msra.mxu0 0.0
    %518 = vmatpush.msra.mxu0 0.0
    %519 = vmatpush.msra.mxu0 0.0
    %520 = vmatpush.msra.mxu0 0.0
    %521 = vmatpush.msra.mxu0 0.0
    %522 = vmatpush.msra.mxu0 0.0
    %523 = vmatpush.msra.mxu0 %v41
    %524 = vmatpush.msra.mxu0 %v39
    %525 = vmatpush.msra.mxu0 %v37
    %526 = vmatpush.msra.mxu0 %v35
    %527 = vmatmul.f32.gmra.mxu0 %v509
    %v528 = vpop.f32.mrf.mxu0
    %v529 = vadd.f32 0.0, %v528
    %530 = vdwg.mxu0
    %531 = vmatpush.msra.mxu0 0.0
    %532 = vmatpush.msra.mxu0 0.0
    %533 = vmatpush.msra.mxu0 0.0
    %534 = vmatpush.msra.mxu0 0.0
    %535 = vmatpush.msra.mxu0 0.0
    %536 = vmatpush.msra.mxu0 0.0
    %537 = vmatpush.msra.mxu0 0.0
    %538 = vmatpush.msra.mxu0 0.0
    %539 = vmatpush.msra.mxu0 0.0
    %540 = vmatpush.msra.mxu0 0.0
    %541 = vmatpush.msra.mxu0 0.0
    %542 = vmatpush.msra.mxu0 0.0
    %543 = vmatpush.msra.mxu0 %v42
    %544 = vmatpush.msra.mxu0 %v40
    %545 = vmatpush.msra.mxu0 %v38
    %546 = vmatpush.msra.mxu0 %v36
    %547 = vmatmul.f32.gmra.mxu0 %v509
    %v548 = vpop.f32.mrf.mxu0
    %v549 = vadd.f32 0.0, %v548
    %550 = vdwg.mxu0
    %552 = vrot.lane.b32.xlu0 %v504, 32
    %v553 = vpop.permute.xlu0 %552
    %v554 = vsel %vm79, %v553, 0
    %556 = vmatpush.msra.mxu0 0.0
    %557 = vmatpush.msra.mxu0 0.0
    %558 = vmatpush.msra.mxu0 0.0
    %559 = vmatpush.msra.mxu0 0.0
    %560 = vmatpush.msra.mxu0 0.0
    %561 = vmatpush.msra.mxu0 0.0
    %562 = vmatpush.msra.mxu0 0.0
    %563 = vmatpush.msra.mxu0 0.0
    %564 = vmatpush.msra.mxu0 0.0
    %565 = vmatpush.msra.mxu0 0.0
    %566 = vmatpush.msra.mxu0 0.0
    %567 = vmatpush.msra.mxu0 0.0
    %568 = vmatpush.msra.mxu0 %v33
    %569 = vmatpush.msra.mxu0 %v31
    %570 = vmatpush.msra.mxu0 %v29
    %571 = vmatpush.msra.mxu0 %v27
    %572 = vmatmul.f32.gmra.mxu0 %v554
    %v573 = vpop.f32.mrf.mxu0
    %v574 = vadd.f32 %v529, %v573
    %575 = vdwg.mxu0
    %576 = vmatpush.msra.mxu0 0.0
    %577 = vmatpush.msra.mxu0 0.0
    %578 = vmatpush.msra.mxu0 0.0
    %579 = vmatpush.msra.mxu0 0.0
    %580 = vmatpush.msra.mxu0 0.0
    %581 = vmatpush.msra.mxu0 0.0
    %582 = vmatpush.msra.mxu0 0.0
    %583 = vmatpush.msra.mxu0 0.0
    %584 = vmatpush.msra.mxu0 0.0
    %585 = vmatpush.msra.mxu0 0.0
    %586 = vmatpush.msra.mxu0 0.0
    %587 = vmatpush.msra.mxu0 0.0
    %588 = vmatpush.msra.mxu0 %v34
    %589 = vmatpush.msra.mxu0 %v32
    %590 = vmatpush.msra.mxu0 %v30
    %591 = vmatpush.msra.mxu0 %v28
    %592 = vmatmul.f32.gmra.mxu0 %v554
    %v593 = vpop.f32.mrf.mxu0
    %v594 = vadd.f32 %v549, %v593
    %595 = vdwg.mxu0
    %v596 = vadd.f32 %v574, %v167
    %v597 = vadd.f32 %v594, %v168
    %v598 = vmax.f32 %v596, 0.0
    %v599 = vmax.f32 %v597, 0.0
    %600 = vmatpush.msra.mxu0 %v59
    %601 = vmatpush.msra.mxu0 %v58
    %602 = vmatpush.msra.mxu0 %v57
    %603 = vmatpush.msra.mxu0 %v56
    %604 = vmatpush.msra.mxu0 %v55
    %605 = vmatpush.msra.mxu0 %v54
    %606 = vmatpush.msra.mxu0 %v53
    %607 = vmatpush.msra.mxu0 %v52
    %608 = vmatpush.msra.mxu0 %v51
    %609 = vmatpush.msra.mxu0 %v50
    %610 = vmatpush.msra.mxu0 %v49
    %611 = vmatpush.msra.mxu0 %v48
    %612 = vmatpush.msra.mxu0 %v47
    %613 = vmatpush.msra.mxu0 %v46
    %614 = vmatpush.msra.mxu0 %v45
    %615 = vmatpush.msra.mxu0 %v44
    %616 = vmatmul.f32.gmra.mxu0 %v598
    %v617 = vpop.f32.mrf.mxu0
    %v618 = vadd.f32 %v176, %v617
    %619 = vdwg.mxu0
    %620 = vmatpush.msra.mxu0 %v75
    %621 = vmatpush.msra.mxu0 %v74
    %622 = vmatpush.msra.mxu0 %v73
    %623 = vmatpush.msra.mxu0 %v72
    %624 = vmatpush.msra.mxu0 %v71
    %625 = vmatpush.msra.mxu0 %v70
    %626 = vmatpush.msra.mxu0 %v69
    %627 = vmatpush.msra.mxu0 %v68
    %628 = vmatpush.msra.mxu0 %v67
    %629 = vmatpush.msra.mxu0 %v66
    %630 = vmatpush.msra.mxu0 %v65
    %631 = vmatpush.msra.mxu0 %v64
    %632 = vmatpush.msra.mxu0 %v63
    %633 = vmatpush.msra.mxu0 %v62
    %634 = vmatpush.msra.mxu0 %v61
    %635 = vmatpush.msra.mxu0 %v60
    %636 = vmatmul.f32.gmra.mxu0 %v599
    %v637 = vpop.f32.mrf.mxu0
    %v638 = vadd.f32 %v618, %v637
    %639 = vdwg.mxu0
    %641 = vrot.lane.b32.xlu0 %v638, 96
    %v642 = vpop.permute.xlu0 %641
    %vm644 = vcmask 1042176
    %645 = vst.msk [vmem:[#allocation2] sm:$0x3] %vm644, %v642
    // Predicated region
    $region30: #{tpu_custom_call.1} parent=1 // pred_check
      _
    $region31: #{tpu_custom_call.1} parent=1 // pred_check_branch
      %647 = sbr.rel (0) target = $region33
    $region32: #{tpu_custom_call.1} parent=1 // pred_region
      %649 = vsyncadd [#allocation3], 0
      %s651 = sshll.u32 [#allocation2], 4
      %s652 = int_to_ptr.vmem [resolvable:$true] %s651
      %s653 = sshll.u32 %s7, 4
      %s654 = int_to_ptr.hbm [resolvable:$true] %s653
      %656 = dma.vmem_to_hbm [thread:$0]  %s652, 32, %s654, [#allocation3]
    $region33: #{tpu_custom_call.1} parent=1 // pred_fallthru
      _
    // Predicated region
    $region34: #{tpu_custom_call.1} parent=1 // pred_check
      _
    $region35: #{tpu_custom_call.1} parent=1 // pred_check_branch
      %658 = sbr.rel (0) target = $region37
    $region36: #{tpu_custom_call.1} parent=1 // pred_region
      %660 = dma.done [#allocation3], 32
    $region37: #{tpu_custom_call.1} parent=1 // pred_fallthru
      _
    %661 = vsyncpa [#allocation3], 1

</llo_original>
